<compile_context>
chip_gen: v6e
topology: v6e:2x2x1
jax: 0.10.0
libtpu: 0.0.40
codegen_flags: <defaults>
</compile_context>

<pallas_src>
import functools

import jax
import jax.numpy as jnp
from jax.experimental import pallas as pl
from jax.experimental.pallas import tpu as pltpu


def _round_up(x, m):
    return ((x + m - 1) // m) * m


def se_block_kernel(x_ref, w1_ref, b1_ref, w2_ref, b2_ref, o_ref):
    # x: (TILE_N, C)   w1: (H, C)   b1: (1, H)   w2: (C, H)   b2: (1, C)
    x = x_ref[...].astype(jnp.float32)

    # Linear(C -> H) + ReLU:  x @ w1.T without materializing a transposed weight.
    # Contraction is over the C (=lane) axis -> MXU-friendly.
    h = jax.lax.dot_general(
        x, w1_ref[...], (((1,), (1,)), ((), ())),
        preferred_element_type=jnp.float32) + b1_ref[...]
    h = jnp.maximum(h, 0.0)

    # Linear(H -> C) + Sigmoid:  h @ w2.T.
    z = jax.lax.dot_general(
        h, w2_ref[...], (((1,), (1,)), ((), ())),
        preferred_element_type=jnp.float32) + b2_ref[...]
    s = jax.nn.sigmoid(z)  # logistic lowers to the EUP slot; not the bottleneck.

    # Gate the input (elementwise, VPU).
    o_ref[...] = (x * s).astype(o_ref.dtype)


@functools.partial(jax.jit, static_argnames=("tile_n",))
def se_block(x, w1, b1, w2, b2, *, tile_n=8192):
    """x: (N, C).  PyTorch-layout params: w1 (H, C), b1 (H,), w2 (C, H), b2 (C,)."""
    n, c = x.shape
    hidden = w1.shape[0]

    # Batch tile: multiple of 8 (sublane), capped at tile_n.
    tn = min(tile_n, _round_up(n, 8))
    grid = (pl.cdiv(n, tn),)

    # Biases lifted to 2-D for TPU-friendly row broadcast.
    b1_2d = jnp.asarray(b1).reshape(1, hidden)
    b2_2d = jnp.asarray(b2).reshape(1, c)

    def resident(shape):
        # Full-array block, constant block index -> DMA'd once, stays in VMEM.
        return pl.BlockSpec(shape, lambda i: (0, 0))

    flops_per_row = 4 * c * hidden + 6 * c  # two GEMVs + bias/relu/sigmoid/gate
    cost = pl.CostEstimate(
        flops=n * flops_per_row,
        transcendentals=n * c,
        bytes_accessed=2 * x.size * x.dtype.itemsize,
    )

    return pl.pallas_call(
        se_block_kernel,
        out_shape=jax.ShapeDtypeStruct((n, c), x.dtype),
        grid=grid,
        in_specs=[
            pl.BlockSpec((tn, c), lambda i: (i, 0)),   # x: streamed per grid step
            resident((hidden, c)),                     # w1 (PyTorch (out, in) layout)
            resident((1, hidden)),                     # b1
            resident((c, hidden)),                     # w2
            resident((1, c)),                          # b2
        ],
        out_specs=pl.BlockSpec((tn, c), lambda i: (i, 0)),
        compiler_params=pltpu.CompilerParams(
            dimension_semantics=("parallel",),         # megacore sharding on v7x
            vmem_limit_bytes=32 * 1024 * 1024,         # fits all chips incl. v7x (64 MiB)
        ),
        cost_estimate=cost,
    )(x, w1, b1_2d, w2, b2_2d)


def se_block_reference(x, w1, b1, w2, b2):
    h = jnp.maximum(x @ w1.T + b1, 0.0)
    s = jax.nn.sigmoid(h @ w2.T + b2)
    return x * s


if __name__ == "__main__":
    # SEBlock(in_channels=128, non_linearity=nn.ReLU, ratio=16) -> hidden = 8.
    in_channels = 128
    ratio = 16
    hidden = in_channels // ratio

    key = jax.random.PRNGKey(0)
    kx, kw1, kb1, kw2, kx2 = jax.random.split(key, 5)

    # PyTorch-layout parameters (Linear weight is (out, in)).
    w1 = jax.random.normal(kw1, (hidden, in_channels), dtype=jnp.float32) * 0.1
    b1 = jax.random.normal(kb1, (hidden,), dtype=jnp.float32) * 0.1
    w2 = jax.random.normal(kw2, (in_channels, hidden), dtype=jnp.float32) * 0.1
    b2 = 4.0 * jnp.ones((in_channels,), dtype=jnp.float32)  # matches se[2].bias = 4*ones

    # Small primary check (single block).
    batch = 8
    x = jax.random.normal(kx, (batch, in_channels), dtype=jnp.float32)
    out = jax.block_until_ready(se_block(x, w1, b1, w2, b2))
    ref = se_block_reference(x, w1, b1, w2, b2)
    assert out.shape == x.shape and out.dtype == x.dtype
    assert jnp.allclose(out, ref, atol=1e-5, rtol=1e-5)

    # Secondary check: multi-block pipelined grid with a non-divisible N (remainder tile).
    x2 = jax.random.normal(kx2, (1000, in_channels), dtype=jnp.float32)
    out2 = jax.block_until_ready(se_block(x2, w1, b1, w2, b2, tile_n=256))
    ref2 = se_block_reference(x2, w1, b1, w2, b2)
    assert jnp.allclose(out2, ref2, atol=1e-5, rtol=1e-5)

    print("KERNEL_OK")
</pallas_src>

<mosaic_0001>
module attributes {stable_mosaic.version = 11 : i64} {
  func.func @se_block_kernel(%arg0: i32, %arg1: memref<8x128xf32, #tpu.memory_space<vmem>>, %arg2: memref<8x128xf32, #tpu.memory_space<vmem>>, %arg3: memref<1x8xf32, #tpu.memory_space<vmem>>, %arg4: memref<128x8xf32, #tpu.memory_space<vmem>>, %arg5: memref<1x128xf32, #tpu.memory_space<vmem>>, %arg6: memref<8x128xf32, #tpu.memory_space<vmem>>) attributes {dimension_semantics = [#tpu.dimension_semantics<parallel>], iteration_bounds = array<i64: 1>, scalar_prefetch = 0 : i64, scratch_operands = 0 : i64, tpu.core_type = #tpu.core_type<tc>, window_params = [{transform_indices = @transform_0, window_bounds = array<i64: 8, 128>}, {pipeline_mode = #tpu.pipeline_mode<synchronous>, transform_indices = @transform_1, window_bounds = array<i64: 8, 128>}, {pipeline_mode = #tpu.pipeline_mode<synchronous>, transform_indices = @transform_2, window_bounds = array<i64: 1, 8>}, {pipeline_mode = #tpu.pipeline_mode<synchronous>, transform_indices = @transform_3, window_bounds = array<i64: 128, 8>}, {pipeline_mode = #tpu.pipeline_mode<synchronous>, transform_indices = @transform_4, window_bounds = array<i64: 1, 128>}, {transform_indices = @transform_5, window_bounds = array<i64: 8, 128>}]} {
    %c0 = arith.constant 0 : index
    %c0_0 = arith.constant 0 : index
    %0 = vector.load %arg1[%c0, %c0_0] : memref<8x128xf32, #tpu.memory_space<vmem>>, vector<8x128xf32>
    %c0_1 = arith.constant 0 : index
    %c0_2 = arith.constant 0 : index
    %1 = vector.load %arg2[%c0_1, %c0_2] : memref<8x128xf32, #tpu.memory_space<vmem>>, vector<8x128xf32>
    %cst = arith.constant dense<0.000000e+00> : vector<8x8xf32>
    %2 = tpu.matmul %0, %1, %cst {dimension_numbers = #tpu.dot_dimension_numbers<[1], [1], [0], [0], [0, 0, 1, 0], [], []>} : vector<8x128xf32>, vector<8x128xf32>, vector<8x8xf32> -> vector<8x8xf32>
    %c0_3 = arith.constant 0 : index
    %c0_4 = arith.constant 0 : index
    %3 = vector.load %arg3[%c0_3, %c0_4] : memref<1x8xf32, #tpu.memory_space<vmem>>, vector<1x8xf32>
    %4 = vector.broadcast %3 : vector<1x8xf32> to vector<8x8xf32>
    %5 = arith.addf %2, %4 : vector<8x8xf32>
    %cst_5 = arith.constant 0.000000e+00 : f32
    %6 = vector.broadcast %cst_5 : f32 to vector<8x8xf32>
    %7 = arith.maximumf %5, %6 : vector<8x8xf32>
    %c0_6 = arith.constant 0 : index
    %c0_7 = arith.constant 0 : index
    %8 = vector.load %arg4[%c0_6, %c0_7] : memref<128x8xf32, #tpu.memory_space<vmem>>, vector<128x8xf32>
    %cst_8 = arith.constant dense<0.000000e+00> : vector<8x128xf32>
    %9 = tpu.matmul %7, %8, %cst_8 {dimension_numbers = #tpu.dot_dimension_numbers<[1], [1], [0], [0], [0, 0, 1, 0], [], []>} : vector<8x8xf32>, vector<128x8xf32>, vector<8x128xf32> -> vector<8x128xf32>
    %c0_9 = arith.constant 0 : index
    %c0_10 = arith.constant 0 : index
    %10 = vector.load %arg5[%c0_9, %c0_10] : memref<1x128xf32, #tpu.memory_space<vmem>>, vector<1x128xf32>
    %11 = vector.broadcast %10 : vector<1x128xf32> to vector<8x128xf32>
    %12 = arith.addf %9, %11 : vector<8x128xf32>
    %13 = arith.negf %12 : vector<8x128xf32>
    %14 = math.exp %13 : vector<8x128xf32>
    %cst_11 = arith.constant 1.000000e+00 : f32
    %15 = vector.broadcast %cst_11 : f32 to vector<8x128xf32>
    %16 = arith.addf %15, %14 : vector<8x128xf32>
    %17 = arith.divf %15, %16 : vector<8x128xf32>
    %18 = arith.mulf %0, %17 : vector<8x128xf32>
    %c0_12 = arith.constant 0 : index
    %c0_13 = arith.constant 0 : index
    %19 = vector.load %arg6[%c0_12, %c0_13] : memref<8x128xf32, #tpu.memory_space<vmem>>, vector<8x128xf32>
    tpu.vector_store %arg6[%c0_12, %c0_13], %18 {strides = array<i32>} : memref<8x128xf32, #tpu.memory_space<vmem>>, vector<8x128xf32>,
    return
  }
  func.func @transform_0(%arg0: i32) -> (i32, i32) {
    %c0_i32 = arith.constant 0 : i32
    %c0_i32_0 = arith.constant 0 : i32
    return %arg0, %c0_i32 : i32, i32
  }
  func.func @transform_1(%arg0: i32) -> (i32, i32) {
    %c0_i32 = arith.constant 0 : i32
    %c0_i32_0 = arith.constant 0 : i32
    %c0_i32_1 = arith.constant 0 : i32
    return %c0_i32, %c0_i32_0 : i32, i32
  }
  func.func @transform_2(%arg0: i32) -> (i32, i32) {
    %c0_i32 = arith.constant 0 : i32
    %c0_i32_0 = arith.constant 0 : i32
    %c0_i32_1 = arith.constant 0 : i32
    return %c0_i32, %c0_i32_0 : i32, i32
  }
  func.func @transform_3(%arg0: i32) -> (i32, i32) {
    %c0_i32 = arith.constant 0 : i32
    %c0_i32_0 = arith.constant 0 : i32
    %c0_i32_1 = arith.constant 0 : i32
    return %c0_i32, %c0_i32_0 : i32, i32
  }
  func.func @transform_4(%arg0: i32) -> (i32, i32) {
    %c0_i32 = arith.constant 0 : i32
    %c0_i32_0 = arith.constant 0 : i32
    %c0_i32_1 = arith.constant 0 : i32
    return %c0_i32, %c0_i32_0 : i32, i32
  }
  func.func @transform_5(%arg0: i32) -> (i32, i32) {
    %c0_i32 = arith.constant 0 : i32
    %c0_i32_0 = arith.constant 0 : i32
    return %arg0, %c0_i32 : i32, i32
  }
}

</mosaic_0001>

<llo_original>
// kernel: se_block.1
$region0: #{se_block.1}
  #allocation0 [shape = 'u32[]', space=smem, size = 0x4, offset = 0x4, fixed_abs, tag = 'smem constant byte address 0x4 - core index']
  #allocation1 [shape = 'u32[144,128]{1,0:T(1,128)}', space=vmem, size = 0x12000, scoped, tag = 'internal scratch']
  %s0 = inlined_call_operand.vmem [shape: f32[8,128], index: 0, kind: input, shape index: {}]
  %s1 = inlined_call_operand.vmem [shape: f32[8,128], index: 1, kind: input, shape index: {}]
  %s2 = inlined_call_operand.vmem [shape: f32[1,8], index: 2, kind: input, shape index: {}]
  %s3 = inlined_call_operand.vmem [shape: f32[128,8], index: 3, kind: input, shape index: {}]
  %s4 = inlined_call_operand.vmem [shape: f32[1,128], index: 4, kind: input, shape index: {}]
  %s5 = inlined_call_operand.hbm [shape: f32[8,128], index: 5, kind: output, shape index: {}]
  %s6 = sld [smem:[#allocation0]]
  $region30: #{se_block.1} parent=0
    _
  %s8 = ssub.s32 1, %s6
  %s9 = scalar_select 0, %s8, %s6
  $region1: #{se_block.1} parent=0
    #allocation2 [shape = 'u8[4096]{0}', space=vmem, size = 0x1000, scoped, tag = 'output window, operand 0, single buffered']
    #allocation3 [shape = 's32[1]{0}', space=sflag, size = 0x4, scoped, tag = 'scoped memory for se_block.1']
    %10 = vsyncpa [#allocation3], 0
    // Predicated region
    $region2: #{se_block.1} parent=1 // pred_check
      _
    $region3: #{se_block.1} parent=1 // pred_check_branch
      %12 = sbr.rel (0) target = $region5
    $region4: #{se_block.1} parent=1 // pred_region
      _
    $region5: #{se_block.1} parent=1 // pred_fallthru
      _
    // Predicated region
    $region6: #{se_block.1} parent=1 // pred_check
      _
    $region7: #{se_block.1} parent=1 // pred_check_branch
      %14 = sbr.rel (0) target = $region9
    $region8: #{se_block.1} parent=1 // pred_region
      _
    $region9: #{se_block.1} parent=1 // pred_fallthru
      _
    // Predicated region
    $region10: #{se_block.1} parent=1 // pred_check
      _
    $region11: #{se_block.1} parent=1 // pred_check_branch
      %16 = sbr.rel (0) target = $region13
    $region12: #{se_block.1} parent=1 // pred_region
      _
    $region13: #{se_block.1} parent=1 // pred_fallthru
      _
    // Predicated region
    $region14: #{se_block.1} parent=1 // pred_check
      _
    $region15: #{se_block.1} parent=1 // pred_check_branch
      %18 = sbr.rel (0) target = $region17
    $region16: #{se_block.1} parent=1 // pred_region
      _
    $region17: #{se_block.1} parent=1 // pred_fallthru
      _
    // Predicated region
    $region18: #{se_block.1} parent=1 // pred_check
      _
    $region19: #{se_block.1} parent=1 // pred_check_branch
      %20 = sbr.rel (0) target = $region21
    $region20: #{se_block.1} parent=1 // pred_region
      _
    $region21: #{se_block.1} parent=1 // pred_fallthru
      _
    %v21 = vld [vmem:[%s0] sm:$0xff]
    %v22 = vld [vmem:[%s1] sm:$0xff]
    %v23 = vld [vmem:[%s2] sm:$0x1]
    %v25 = vlaneseq
    %v26 = vshrl.u32 %v25, 7
    %v27 = vsub.s32 0, %v26
    %v28 = vrot.slane %v23, %v27
    %30 = vmatprep.subr.mxu0 0.0
    %31 = vmatpush1.xpose.msra.mxu0 0.0
    %32 = vmatprep.subr.mxu0 0.0
    %33 = vmatpush1.xpose.msra.mxu0 0.0
    %34 = vmatprep.subr.mxu0 0.0
    %35 = vmatpush1.xpose.msra.mxu0 0.0
    %36 = vmatprep.subr.mxu0 0.0
    %37 = vmatpush1.xpose.msra.mxu0 0.0
    %38 = vmatprep.subr.mxu0 0.0
    %39 = vmatpush1.xpose.msra.mxu0 0.0
    %40 = vmatprep.subr.mxu0 0.0
    %41 = vmatpush1.xpose.msra.mxu0 0.0
    %42 = vmatprep.subr.mxu0 0.0
    %43 = vmatpush1.xpose.msra.mxu0 0.0
    %44 = vmatprep.subr.mxu0 0.0
    %45 = vmatpush1.xpose.msra.mxu0 0.0
    %46 = vmatprep.subr.mxu0 0.0
    %47 = vmatpush1.xpose.msra.mxu0 0.0
    %48 = vmatprep.subr.mxu0 0.0
    %49 = vmatpush1.xpose.msra.mxu0 0.0
    %50 = vmatprep.subr.mxu0 0.0
    %51 = vmatpush1.xpose.msra.mxu0 0.0
    %52 = vmatprep.subr.mxu0 0.0
    %53 = vmatpush1.xpose.msra.mxu0 0.0
    %54 = vmatprep.subr.mxu0 0.0
    %55 = vmatpush1.xpose.msra.mxu0 0.0
    %56 = vmatprep.subr.mxu0 0.0
    %57 = vmatpush1.xpose.msra.mxu0 0.0
    %58 = vmatprep.subr.mxu0 0.0
    %59 = vmatpush1.xpose.msra.mxu0 0.0
    %60 = vmatprep.subr.mxu0 0.0
    %61 = vmatpush1.xpose.msra.mxu0 %v22
    %62 = vmatprep.subr.mxu0 0.0
    %63 = vmatpush2.xpose.msra.mxu0 0.0
    %64 = vmatprep.subr.mxu0 0.0
    %65 = vmatpush2.xpose.msra.mxu0 0.0
    %66 = vmatprep.subr.mxu0 0.0
    %67 = vmatpush2.xpose.msra.mxu0 0.0
    %68 = vmatprep.subr.mxu0 0.0
    %69 = vmatpush2.xpose.msra.mxu0 0.0
    %70 = vmatprep.subr.mxu0 0.0
    %71 = vmatpush2.xpose.msra.mxu0 0.0
    %72 = vmatprep.subr.mxu0 0.0
    %73 = vmatpush2.xpose.msra.mxu0 0.0
    %74 = vmatprep.subr.mxu0 0.0
    %75 = vmatpush2.xpose.msra.mxu0 0.0
    %76 = vmatprep.subr.mxu0 0.0
    %77 = vmatpush2.xpose.msra.mxu0 0.0
    %78 = vmatprep.subr.mxu0 0.0
    %79 = vmatpush2.xpose.msra.mxu0 0.0
    %80 = vmatprep.subr.mxu0 0.0
    %81 = vmatpush2.xpose.msra.mxu0 0.0
    %82 = vmatprep.subr.mxu0 0.0
    %83 = vmatpush2.xpose.msra.mxu0 0.0
    %84 = vmatprep.subr.mxu0 0.0
    %85 = vmatpush2.xpose.msra.mxu0 0.0
    %86 = vmatprep.subr.mxu0 0.0
    %87 = vmatpush2.xpose.msra.mxu0 0.0
    %88 = vmatprep.subr.mxu0 0.0
    %89 = vmatpush2.xpose.msra.mxu0 0.0
    %90 = vmatprep.subr.mxu0 0.0
    %91 = vmatpush2.xpose.msra.mxu0 0.0
    %92 = vmatprep.subr.mxu0 0.0
    %93 = vmatpush2.xpose.msra.mxu0 0.0
    %94 = vmatprep.mubr.f32.mxu0 0.0
    %95 = vmatmul.mubr.f32.gmra.mxu0 %v21
    %v96 = vpop.f32.mrf.mxu0
    %v97 = vadd.f32 %v28, %v96
    %v98 = vpop.f32.mrf.mxu0
    %99 = vdwg.mxu0
    %v100 = vmax.f32 %v97, 0.0
    %v101 = vld [vmem:[%s3] sm:$0xff]
    %v102 = vld [vmem:[%s3 + $0x8] sm:$0xff]
    %v103 = vld [vmem:[%s3 + $0x10] sm:$0xff]
    %v104 = vld [vmem:[%s3 + $0x18] sm:$0xff]
    %v105 = vld [vmem:[%s3 + $0x20] sm:$0xff]
    %v106 = vld [vmem:[%s3 + $0x28] sm:$0xff]
    %v107 = vld [vmem:[%s3 + $0x30] sm:$0xff]
    %v108 = vld [vmem:[%s3 + $0x38] sm:$0xff]
    %v109 = vld [vmem:[%s3 + $0x40] sm:$0xff]
    %v110 = vld [vmem:[%s3 + $0x48] sm:$0xff]
    %v111 = vld [vmem:[%s3 + $0x50] sm:$0xff]
    %v112 = vld [vmem:[%s3 + $0x58] sm:$0xff]
    %v113 = vld [vmem:[%s3 + $0x60] sm:$0xff]
    %v114 = vld [vmem:[%s3 + $0x68] sm:$0xff]
    %v115 = vld [vmem:[%s3 + $0x70] sm:$0xff]
    %v116 = vld [vmem:[%s3 + $0x78] sm:$0xff]
    %v117 = vld [vmem:[%s4] sm:$0x1]
    %v119 = vlaneseq
    %v120 = vshrl.u32 %v119, 7
    %v121 = vsub.s32 0, %v120
    %v122 = vrot.slane %v117, %v121
    %vm124 = vcmask 64512
    %v126 = vsel %vm124, %v100, 0
    %v129 = vsel %vm124, %v101, 0
    %v132 = vsel %vm124, %v102, 0
    %v135 = vsel %vm124, %v103, 0
    %v138 = vsel %vm124, %v104, 0
    %v141 = vsel %vm124, %v105, 0
    %v144 = vsel %vm124, %v106, 0
    %v147 = vsel %vm124, %v107, 0
    %v150 = vsel %vm124, %v108, 0
    %v153 = vsel %vm124, %v109, 0
    %v156 = vsel %vm124, %v110, 0
    %v159 = vsel %vm124, %v111, 0
    %v162 = vsel %vm124, %v112, 0
    %v165 = vsel %vm124, %v113, 0
    %v168 = vsel %vm124, %v114, 0
    %v171 = vsel %vm124, %v115, 0
    %v174 = vsel %vm124, %v116, 0
    %176 = vmatprep.subr.mxu0 0.0
    %177 = vmatpush1.xpose.msra.mxu0 %v174
    %178 = vmatprep.subr.mxu0 0.0
    %179 = vmatpush1.xpose.msra.mxu0 %v171
    %180 = vmatprep.subr.mxu0 0.0
    %181 = vmatpush1.xpose.msra.mxu0 %v168
    %182 = vmatprep.subr.mxu0 0.0
    %183 = vmatpush1.xpose.msra.mxu0 %v165
    %184 = vmatprep.subr.mxu0 0.0
    %185 = vmatpush1.xpose.msra.mxu0 %v162
    %186 = vmatprep.subr.mxu0 0.0
    %187 = vmatpush1.xpose.msra.mxu0 %v159
    %188 = vmatprep.subr.mxu0 0.0
    %189 = vmatpush1.xpose.msra.mxu0 %v156
    %190 = vmatprep.subr.mxu0 0.0
    %191 = vmatpush1.xpose.msra.mxu0 %v153
    %192 = vmatprep.subr.mxu0 0.0
    %193 = vmatpush1.xpose.msra.mxu0 %v150
    %194 = vmatprep.subr.mxu0 0.0
    %195 = vmatpush1.xpose.msra.mxu0 %v147
    %196 = vmatprep.subr.mxu0 0.0
    %197 = vmatpush1.xpose.msra.mxu0 %v144
    %198 = vmatprep.subr.mxu0 0.0
    %199 = vmatpush1.xpose.msra.mxu0 %v141
    %200 = vmatprep.subr.mxu0 0.0
    %201 = vmatpush1.xpose.msra.mxu0 %v138
    %202 = vmatprep.subr.mxu0 0.0
    %203 = vmatpush1.xpose.msra.mxu0 %v135
    %204 = vmatprep.subr.mxu0 0.0
    %205 = vmatpush1.xpose.msra.mxu0 %v132
    %206 = vmatprep.subr.mxu0 0.0
    %207 = vmatpush1.xpose.msra.mxu0 %v129
    %208 = vmatprep.subr.mxu0 0.0
    %209 = vmatpush2.xpose.msra.mxu0 0.0
    %210 = vmatprep.subr.mxu0 0.0
    %211 = vmatpush2.xpose.msra.mxu0 0.0
    %212 = vmatprep.subr.mxu0 0.0
    %213 = vmatpush2.xpose.msra.mxu0 0.0
    %214 = vmatprep.subr.mxu0 0.0
    %215 = vmatpush2.xpose.msra.mxu0 0.0
    %216 = vmatprep.subr.mxu0 0.0
    %217 = vmatpush2.xpose.msra.mxu0 0.0
    %218 = vmatprep.subr.mxu0 0.0
    %219 = vmatpush2.xpose.msra.mxu0 0.0
    %220 = vmatprep.subr.mxu0 0.0
    %221 = vmatpush2.xpose.msra.mxu0 0.0
    %222 = vmatprep.subr.mxu0 0.0
    %223 = vmatpush2.xpose.msra.mxu0 0.0
    %224 = vmatprep.subr.mxu0 0.0
    %225 = vmatpush2.xpose.msra.mxu0 0.0
    %226 = vmatprep.subr.mxu0 0.0
    %227 = vmatpush2.xpose.msra.mxu0 0.0
    %228 = vmatprep.subr.mxu0 0.0
    %229 = vmatpush2.xpose.msra.mxu0 0.0
    %230 = vmatprep.subr.mxu0 0.0
    %231 = vmatpush2.xpose.msra.mxu0 0.0
    %232 = vmatprep.subr.mxu0 0.0
    %233 = vmatpush2.xpose.msra.mxu0 0.0
    %234 = vmatprep.subr.mxu0 0.0
    %235 = vmatpush2.xpose.msra.mxu0 0.0
    %236 = vmatprep.subr.mxu0 0.0
    %237 = vmatpush2.xpose.msra.mxu0 0.0
    %238 = vmatprep.subr.mxu0 0.0
    %239 = vmatpush2.xpose.msra.mxu0 0.0
    %240 = vmatprep.mubr.f32.mxu0 0.0
    %241 = vmatmul.mubr.f32.gmra.mxu0 %v126
    %v242 = vpop.f32.mrf.mxu0
    %v243 = vadd.f32 %v122, %v242
    %v244 = vpop.f32.mrf.mxu0
    %245 = vdwg.mxu0
    %v246 = vxor.u32 %v243, 2147483648
    %v247 = vmul.f32 %v246, 1.442695
    %v248 = vpow.pop %v247
    %v249 = vadd.f32 %v248, 1.0
    %v250 = vrcp.pop %v249
    %v251 = vmul.f32 1.0, %v250
    %v252 = vmul.f32 %v21, %v251
    %253 = vst [vmem:[#allocation2] sm:$0xff] %v252
    // Predicated region
    $region22: #{se_block.1} parent=1 // pred_check
      _
    $region23: #{se_block.1} parent=1 // pred_check_branch
      %255 = sbr.rel (0) target = $region25
    $region24: #{se_block.1} parent=1 // pred_region
      %s257 = ssub.s32 128, 128
      %258 = vsyncadd [#allocation3], %s257
      %s260 = sshll.u32 [#allocation2], 4
      %s261 = int_to_ptr.vmem [resolvable:$true] %s260
      %263 = dma.vmem_to_hbm [thread:$0]  %s261, 128, %s5, [#allocation3]
    $region25: #{se_block.1} parent=1 // pred_fallthru
      _
    // Predicated region
    $region26: #{se_block.1} parent=1 // pred_check
      _
    $region27: #{se_block.1} parent=1 // pred_check_branch
      %265 = sbr.rel (0) target = $region29
    $region28: #{se_block.1} parent=1 // pred_region
      %266 = dma.done [#allocation3], 128
    $region29: #{se_block.1} parent=1 // pred_fallthru
      _
    %267 = vsyncpa [#allocation3], 1

</llo_original>
